<compile_context>
chip_gen: v7x
topology: tpu7x:2x2x1
jax: 0.10.0
libtpu: 0.0.40
codegen_flags: <defaults>
</compile_context>

<pallas_src>
import jax
import jax.numpy as jnp
from jax.experimental import pallas as pl
from jax.experimental.pallas import tpu as pltpu

HID1 = 256
HID2 = 64
HID2_PAD = 128        # lane-dense hidden width (zero-padded, bit-identical result)
LANE = 128
SUBLANE_BF16 = 16     # bf16 packs 16 rows per vreg sublane group
NEG_BIG = -1e30       # padded logit columns -> exp underflows to exactly 0
TB_MAX = 2048         # max batch tile; whole per-tile working set stays ~10 MiB


def _round_up(x, m):
    return ((x + m - 1) // m) * m


def fcn_kernel(obs_ref, w1_ref, b1_ref, w2_ref, b2_ref, w3_ref, b3_ref, out_ref):
    """One batch tile of the fused MLP forward."""
    x = obs_ref[...]                                   # bf16 (TB, in_dim)

    # fc1 + relu  (bf16 operands, f32 accumulate on the MXU)
    h1 = jnp.dot(x, w1_ref[...], preferred_element_type=jnp.float32) + b1_ref[...]
    h1 = jnp.maximum(h1, 0.0).astype(jnp.bfloat16)

    # fc2 + relu
    h2 = jnp.dot(h1, w2_ref[...], preferred_element_type=jnp.float32) + b2_ref[...]
    h2 = jnp.maximum(h2, 0.0).astype(jnp.bfloat16)

    # fc3 (padded logit columns have bias = NEG_BIG -> contribute exactly 0 to softmax)
    logits = jnp.dot(h2, w3_ref[...], preferred_element_type=jnp.float32) + b3_ref[...]

    # numerically stable softmax over the (lane-dense) last axis
    m = jnp.max(logits, axis=-1, keepdims=True)
    e = jnp.exp(logits - m)
    # TODO(synk): on v6e/v7x this row-sum could be pushed to the (mostly idle) MXU via a
    # dot with a ones vector to relieve XLU pressure; kept on the XLU for lowering robustness.
    denom = jnp.sum(e, axis=-1, keepdims=True)
    out_ref[...] = (e * pl.reciprocal(denom, approx=True)).astype(out_ref.dtype)


def init_params(key, obs_dim, act_dim):
    """Deterministic init mimicking torch.nn.Linear's U(-1/sqrt(fan_in), 1/sqrt(fan_in)).

    Natural (unpadded) layout: w is (in_features, out_features), b is (1, out_features),
    so y = x @ w + b matches torch's y = x @ W.T + b.
    """
    ks = jax.random.split(key, 6)

    def linear(kw, kb, fan_in, fan_out):
        bound = 1.0 / jnp.sqrt(jnp.float32(fan_in))
        w = jax.random.uniform(kw, (fan_in, fan_out), jnp.float32, -bound, bound)
        b = jax.random.uniform(kb, (1, fan_out), jnp.float32, -bound, bound)
        return w, b

    w1, b1 = linear(ks[0], ks[1], obs_dim, HID1)
    w2, b2 = linear(ks[2], ks[3], HID1, HID2)
    w3, b3 = linear(ks[4], ks[5], HID2, act_dim)
    return {"w1": w1, "b1": b1, "w2": w2, "b2": b2, "w3": w3, "b3": b3}


def prepare_params(params):
    """One-time packing: pad hid2 -> 128, act_dim -> 128, (optionally) obs_dim -> k*128,
    and cast weights to bf16.

    hid2 padding uses zero columns in (w2, b2) and zero rows in w3 => bit-identical.
    act_dim padding puts NEG_BIG in the padded b3 columns so those logits vanish from
    the softmax; the wrapper slices the real columns back out.
    obs_dim is padded (zero rows of w1 / zero columns of obs) only when it is larger
    than one lane and lane-ragged; at tiny obs_dim it is not worth the extra bytes.
    """
    obs_dim = params["w1"].shape[0]
    act_dim = params["w3"].shape[1]
    adp = max(LANE, _round_up(act_dim, LANE))

    if obs_dim > LANE and obs_dim % LANE:
        in_dim = _round_up(obs_dim, LANE)
    else:
        in_dim = obs_dim

    w1p = jnp.pad(params["w1"], ((0, in_dim - obs_dim), (0, 0)))
    w2p = jnp.pad(params["w2"], ((0, 0), (0, HID2_PAD - HID2)))
    b2p = jnp.pad(params["b2"], ((0, 0), (0, HID2_PAD - HID2)))
    w3p = jnp.pad(params["w3"], ((0, HID2_PAD - HID2), (0, adp - act_dim)))
    b3p = jnp.pad(params["b3"], ((0, 0), (0, adp - act_dim)), constant_values=NEG_BIG)

    return {
        "w1": w1p.astype(jnp.bfloat16),
        "b1": params["b1"].astype(jnp.float32),
        "w2": w2p.astype(jnp.bfloat16),
        "b2": b2p.astype(jnp.float32),
        "w3": w3p.astype(jnp.bfloat16),
        "b3": b3p.astype(jnp.float32),
        "act_dim": act_dim,
    }


def fcn_forward(obs, p):
    """obs: (B, obs_dim) float32; p: prepare_params() output. Returns (B, act_dim) f32 probs."""
    B, obs_dim = obs.shape
    act_dim = p["act_dim"]
    in_dim = p["w1"].shape[0]          # possibly lane-padded obs_dim
    h1 = p["w1"].shape[1]
    h2 = p["w2"].shape[1]
    adp = p["w3"].shape[1]

    # Derive the tile count first so batch padding is bounded by the 16-row bf16
    # sublane granule (not by TB). Always use an even number (>=2) of tiles so the
    # "parallel" batch axis shards evenly across both v7x TensorCores; the extra grid
    # step is ~0.35us and irrelevant on single-core v5e/v6e.
    n_tiles = max(2, pl.cdiv(B, TB_MAX))
    if n_tiles % 2:
        n_tiles += 1
    TB = _round_up(pl.cdiv(B, n_tiles), SUBLANE_BF16)
    B_pad = TB * n_tiles

    obs_p = obs.astype(jnp.bfloat16)
    if B_pad != B or in_dim != obs_dim:
        obs_p = jnp.pad(obs_p, ((0, B_pad - B), (0, in_dim - obs_dim)))

    const2d = lambda shape: pl.BlockSpec(shape, lambda i: (0, 0))  # VMEM-resident weights

    cost = pl.CostEstimate(
        flops=2 * B_pad * (in_dim * h1 + h1 * h2 + h2 * adp),
        transcendentals=B_pad * adp,
        bytes_accessed=(obs_p.size * 2                                        # bf16 obs in
                        + (p["w1"].size + p["w2"].size + p["w3"].size) * 2    # bf16 weights
                        + (p["b1"].size + p["b2"].size + p["b3"].size) * 4    # f32 biases
                        + B_pad * adp * 2),                                   # bf16 probs out
    )

    out = pl.pallas_call(
        fcn_kernel,
        out_shape=jax.ShapeDtypeStruct((B_pad, adp), jnp.bfloat16),
        grid_spec=pltpu.PrefetchScalarGridSpec(
            num_scalar_prefetch=0,
            grid=(n_tiles,),
            in_specs=[
                pl.BlockSpec((TB, in_dim), lambda i: (i, 0)),
                const2d((in_dim, h1)),
                const2d((1, h1)),
                const2d((h1, h2)),
                const2d((1, h2)),
                const2d((h2, adp)),
                const2d((1, adp)),
            ],
            out_specs=pl.BlockSpec((TB, adp), lambda i: (i, 0)),
        ),
        compiler_params=pltpu.CompilerParams(
            dimension_semantics=("parallel",),
            vmem_limit_bytes=32 * 1024 * 1024,   # raise v5e's 16 MiB default; safe everywhere
        ),
        cost_estimate=cost,
    )(obs_p, p["w1"], p["b1"], p["w2"], p["b2"], p["w3"], p["b3"])

    return out[:B, :act_dim].astype(jnp.float32)


if __name__ == "__main__":
    key = jax.random.PRNGKey(0)
    k_obs, k_obs2, k_params = jax.random.split(key, 3)

    obs_dim, act_dim = 16, 4
    params = init_params(k_params, obs_dim, act_dim)
    packed = prepare_params(params)

    # pure-JAX fp32 reference (same forward semantics as the PyTorch module)
    def ref(o, q):
        a = jnp.maximum(o @ q["w1"] + q["b1"], 0.0)
        a = jnp.maximum(a @ q["w2"] + q["b2"], 0.0)
        return jax.nn.softmax(a @ q["w3"] + q["b3"], axis=-1)

    # Case 1: tiny batch
    B = 8
    obs = jax.random.normal(k_obs, (B, obs_dim), jnp.float32)
    prob = jax.block_until_ready(fcn_forward(obs, packed))
    expected = ref(obs, params)
    assert prob.shape == (B, act_dim)
    assert bool(jnp.allclose(jnp.sum(prob, axis=-1), 1.0, atol=1e-2))   # bf16 + approx recip
    assert bool(jnp.allclose(prob, expected, atol=3e-2))                # bf16 tolerance

    # Case 2: batch that is not a multiple of the tile (exercises padding-derived TB)
    B2 = 37
    obs2 = jax.random.normal(k_obs2, (B2, obs_dim), jnp.float32)
    prob2 = jax.block_until_ready(fcn_forward(obs2, packed))
    expected2 = ref(obs2, params)
    assert prob2.shape == (B2, act_dim)
    assert bool(jnp.allclose(jnp.sum(prob2, axis=-1), 1.0, atol=1e-2))
    assert bool(jnp.allclose(prob2, expected2, atol=3e-2))

    print("KERNEL_OK")
</pallas_src>

<mosaic_0001>
module attributes {stable_mosaic.version = 11 : i64} {
  func.func @fcn_kernel(%arg0: i32, %arg1: memref<16x16xbf16, #tpu.memory_space<vmem>>, %arg2: memref<16x256xbf16, #tpu.memory_space<vmem>>, %arg3: memref<1x256xf32, #tpu.memory_space<vmem>>, %arg4: memref<256x128xbf16, #tpu.memory_space<vmem>>, %arg5: memref<1x128xf32, #tpu.memory_space<vmem>>, %arg6: memref<128x128xbf16, #tpu.memory_space<vmem>>, %arg7: memref<1x128xf32, #tpu.memory_space<vmem>>, %arg8: memref<16x128xbf16, #tpu.memory_space<vmem>>) attributes {dimension_semantics = [#tpu.dimension_semantics<parallel>], iteration_bounds = array<i64: 2>, scalar_prefetch = 0 : i64, scratch_operands = 0 : i64, tpu.core_type = #tpu.core_type<tc>, window_params = [{transform_indices = @transform_0, window_bounds = array<i64: 16, 16>}, {pipeline_mode = #tpu.pipeline_mode<synchronous>, transform_indices = @transform_1, window_bounds = array<i64: 16, 256>}, {pipeline_mode = #tpu.pipeline_mode<synchronous>, transform_indices = @transform_2, window_bounds = array<i64: 1, 256>}, {pipeline_mode = #tpu.pipeline_mode<synchronous>, transform_indices = @transform_3, window_bounds = array<i64: 256, 128>}, {pipeline_mode = #tpu.pipeline_mode<synchronous>, transform_indices = @transform_4, window_bounds = array<i64: 1, 128>}, {pipeline_mode = #tpu.pipeline_mode<synchronous>, transform_indices = @transform_5, window_bounds = array<i64: 128, 128>}, {pipeline_mode = #tpu.pipeline_mode<synchronous>, transform_indices = @transform_6, window_bounds = array<i64: 1, 128>}, {transform_indices = @transform_7, window_bounds = array<i64: 16, 128>}]} {
    %c0 = arith.constant 0 : index
    %c0_0 = arith.constant 0 : index
    %0 = vector.load %arg1[%c0, %c0_0] : memref<16x16xbf16, #tpu.memory_space<vmem>>, vector<16x16xbf16>
    %c0_1 = arith.constant 0 : index
    %c0_2 = arith.constant 0 : index
    %1 = vector.load %arg2[%c0_1, %c0_2] : memref<16x256xbf16, #tpu.memory_space<vmem>>, vector<16x256xbf16>
    %cst = arith.constant dense<0.000000e+00> : vector<16x256xf32>
    %2 = tpu.matmul %0, %1, %cst {dimension_numbers = #tpu.dot_dimension_numbers<[1], [0], [0], [1], [0, 0, 1, 1], [], []>} : vector<16x16xbf16>, vector<16x256xbf16>, vector<16x256xf32> -> vector<16x256xf32>
    %c0_3 = arith.constant 0 : index
    %c0_4 = arith.constant 0 : index
    %3 = vector.load %arg3[%c0_3, %c0_4] : memref<1x256xf32, #tpu.memory_space<vmem>>, vector<1x256xf32>
    %4 = vector.broadcast %3 : vector<1x256xf32> to vector<16x256xf32>
    %5 = arith.addf %2, %4 : vector<16x256xf32>
    %cst_5 = arith.constant 0.000000e+00 : f32
    %6 = vector.broadcast %cst_5 : f32 to vector<16x256xf32>
    %7 = arith.maximumf %5, %6 : vector<16x256xf32>
    %8 = arith.truncf %7 : vector<16x256xf32> to vector<16x256xbf16>
    %c0_6 = arith.constant 0 : index
    %c0_7 = arith.constant 0 : index
    %9 = vector.load %arg4[%c0_6, %c0_7] : memref<256x128xbf16, #tpu.memory_space<vmem>>, vector<256x128xbf16>
    %cst_8 = arith.constant dense<0.000000e+00> : vector<16x128xf32>
    %10 = tpu.matmul %8, %9, %cst_8 {dimension_numbers = #tpu.dot_dimension_numbers<[1], [0], [0], [1], [0, 0, 1, 1], [], []>} : vector<16x256xbf16>, vector<256x128xbf16>, vector<16x128xf32> -> vector<16x128xf32>
    %c0_9 = arith.constant 0 : index
    %c0_10 = arith.constant 0 : index
    %11 = vector.load %arg5[%c0_9, %c0_10] : memref<1x128xf32, #tpu.memory_space<vmem>>, vector<1x128xf32>
    %12 = vector.broadcast %11 : vector<1x128xf32> to vector<16x128xf32>
    %13 = arith.addf %10, %12 : vector<16x128xf32>
    %cst_11 = arith.constant 0.000000e+00 : f32
    %14 = vector.broadcast %cst_11 : f32 to vector<16x128xf32>
    %15 = arith.maximumf %13, %14 : vector<16x128xf32>
    %16 = arith.truncf %15 : vector<16x128xf32> to vector<16x128xbf16>
    %c0_12 = arith.constant 0 : index
    %c0_13 = arith.constant 0 : index
    %17 = vector.load %arg6[%c0_12, %c0_13] : memref<128x128xbf16, #tpu.memory_space<vmem>>, vector<128x128xbf16>
    %cst_14 = arith.constant dense<0.000000e+00> : vector<16x128xf32>
    %18 = tpu.matmul %16, %17, %cst_14 {dimension_numbers = #tpu.dot_dimension_numbers<[1], [0], [0], [1], [0, 0, 1, 1], [], []>} : vector<16x128xbf16>, vector<128x128xbf16>, vector<16x128xf32> -> vector<16x128xf32>
    %c0_15 = arith.constant 0 : index
    %c0_16 = arith.constant 0 : index
    %19 = vector.load %arg7[%c0_15, %c0_16] : memref<1x128xf32, #tpu.memory_space<vmem>>, vector<1x128xf32>
    %20 = vector.broadcast %19 : vector<1x128xf32> to vector<16x128xf32>
    %21 = arith.addf %18, %20 : vector<16x128xf32>
    %cst_17 = arith.constant dense<0xFF800000> : vector<16xf32>
    %22 = vector.multi_reduction <maximumf>, %21, %cst_17 [1] : vector<16x128xf32> to vector<16xf32>
    %23 = vector.shape_cast %22 : vector<16xf32> to vector<16x1xf32>
    %24 = vector.broadcast %23 : vector<16x1xf32> to vector<16x128xf32>
    %25 = arith.subf %21, %24 : vector<16x128xf32>
    %26 = math.exp %25 : vector<16x128xf32>
    %cst_18 = arith.constant dense<0.000000e+00> : vector<16xf32>
    %27 = vector.multi_reduction <add>, %26, %cst_18 [1] : vector<16x128xf32> to vector<16xf32>
    %28 = vector.shape_cast %27 : vector<16xf32> to vector<16x1xf32>
    %29 = tpu.reciprocal %28 {approx = true} : vector<16x1xf32> -> vector<16x1xf32>
    %30 = vector.broadcast %29 : vector<16x1xf32> to vector<16x128xf32>
    %31 = arith.mulf %26, %30 : vector<16x128xf32>
    %32 = arith.truncf %31 : vector<16x128xf32> to vector<16x128xbf16>
    %c0_19 = arith.constant 0 : index
    %c0_20 = arith.constant 0 : index
    %33 = vector.load %arg8[%c0_19, %c0_20] : memref<16x128xbf16, #tpu.memory_space<vmem>>, vector<16x128xbf16>
    tpu.vector_store %arg8[%c0_19, %c0_20], %32 {strides = array<i32>} : memref<16x128xbf16, #tpu.memory_space<vmem>>, vector<16x128xbf16>,
    return
  }
  func.func @transform_0(%arg0: i32) -> (i32, i32) {
    %c0_i32 = arith.constant 0 : i32
    %c0_i32_0 = arith.constant 0 : i32
    return %arg0, %c0_i32 : i32, i32
  }
  func.func @transform_1(%arg0: i32) -> (i32, i32) {
    %c0_i32 = arith.constant 0 : i32
    %c0_i32_0 = arith.constant 0 : i32
    %c0_i32_1 = arith.constant 0 : i32
    return %c0_i32, %c0_i32_0 : i32, i32
  }
  func.func @transform_2(%arg0: i32) -> (i32, i32) {
    %c0_i32 = arith.constant 0 : i32
    %c0_i32_0 = arith.constant 0 : i32
    %c0_i32_1 = arith.constant 0 : i32
    return %c0_i32, %c0_i32_0 : i32, i32
  }
  func.func @transform_3(%arg0: i32) -> (i32, i32) {
    %c0_i32 = arith.constant 0 : i32
    %c0_i32_0 = arith.constant 0 : i32
    %c0_i32_1 = arith.constant 0 : i32
    return %c0_i32, %c0_i32_0 : i32, i32
  }
  func.func @transform_4(%arg0: i32) -> (i32, i32) {
    %c0_i32 = arith.constant 0 : i32
    %c0_i32_0 = arith.constant 0 : i32
    %c0_i32_1 = arith.constant 0 : i32
    return %c0_i32, %c0_i32_0 : i32, i32
  }
  func.func @transform_5(%arg0: i32) -> (i32, i32) {
    %c0_i32 = arith.constant 0 : i32
    %c0_i32_0 = arith.constant 0 : i32
    %c0_i32_1 = arith.constant 0 : i32
    return %c0_i32, %c0_i32_0 : i32, i32
  }
  func.func @transform_6(%arg0: i32) -> (i32, i32) {
    %c0_i32 = arith.constant 0 : i32
    %c0_i32_0 = arith.constant 0 : i32
    %c0_i32_1 = arith.constant 0 : i32
    return %c0_i32, %c0_i32_0 : i32, i32
  }
  func.func @transform_7(%arg0: i32) -> (i32, i32) {
    %c0_i32 = arith.constant 0 : i32
    %c0_i32_0 = arith.constant 0 : i32
    return %arg0, %c0_i32 : i32, i32
  }
}

</mosaic_0001>

<llo_original>
// kernel: tpu_custom_call.1
$region0: #{tpu_custom_call.1}
  #allocation0 [shape = 'u32[]', space=smem, size = 0x4, offset = 0x4, fixed_abs, tag = 'smem constant byte address 0x4 - core index']
  #allocation1 [shape = 'u32[144,128]{1,0:T(1,128)}', space=vmem, size = 0x12000, scoped, tag = 'internal scratch']
  %s0 = inlined_call_operand.vmem [shape: bf16[32,16], index: 0, kind: input, shape index: {}]
  %s1 = inlined_call_operand.vmem [shape: bf16[16,256], index: 1, kind: input, shape index: {}]
  %s2 = inlined_call_operand.vmem [shape: f32[1,256], index: 2, kind: input, shape index: {}]
  %s3 = inlined_call_operand.hbm [shape: bf16[256,128], index: 3, kind: input, shape index: {}]
  %s4 = inlined_call_operand.vmem [shape: f32[1,128], index: 4, kind: input, shape index: {}]
  %s5 = inlined_call_operand.hbm [shape: bf16[128,128], index: 5, kind: input, shape index: {}]
  %s6 = inlined_call_operand.vmem [shape: f32[1,128], index: 6, kind: input, shape index: {}]
  %s7 = inlined_call_operand.hbm [shape: bf16[32,128], index: 7, kind: output, shape index: {}]
  %s8 = sld [smem:[#allocation0]]
  $region69: #{tpu_custom_call.1} parent=0
    _
  %s10 = ssub.s32 1, %s8
  %s11 = scalar_select 0, %s10, %s8
  $region1: #{tpu_custom_call.1} parent=0
    #allocation2 [shape = 'u8[65536]{0}', space=vmem, size = 0x10000, scoped, tag = 'input window, operand 3, single buffered']
    #allocation3 [shape = 's32[2]{0}', space=sflag, size = 0x8, scoped, tag = 'scoped memory for tpu_custom_call.1']
    #allocation4 [shape = 's32[2]{0}', space=sflag, size = 0x8, scoped, tag = 'scoped memory for tpu_custom_call.1']
    #allocation5 [shape = 'u8[32768]{0}', space=vmem, size = 0x8000, scoped, tag = 'input window, operand 5, single buffered']
    #allocation6 [shape = 's32[1]{0}', space=sflag, size = 0x4, scoped, tag = 'scoped memory for tpu_custom_call.1']
    #allocation7 [shape = 'u8[8192]{0}', space=vmem, size = 0x2000, scoped, tag = 'output window, operand 0']
    %12 = vsyncpa [#allocation3], 0
    %13 = vsyncpa [#allocation6], 0
    %14 = vsyncpa [#allocation4], 0
    %s15 = scalar_lea.sflag [#allocation4], 1
    %16 = vsyncpa %s15, 0
    loop: start=0, step=1, limit=4
    $region2: #{tpu_custom_call.1} parent=1 // loop_pre_header
      _
    $region3: #{tpu_custom_call.1} parent=1 // loop_header
      %s18 = sphi 0, %s22
      %p19 = scmp.ge.s32.totalorder %s18, 4
      %s28 = sphi 0, %s30
      %s31 = sphi 0, %s28
      %s32 = sphi 0, %s31
      %s48 = sphi 0, %s32
      %s52 = sphi 0, %s52
      %s54 = sphi 0, %s52
      %s55 = sphi 0, %s54
      %s69 = sphi 0, %s55
      %s73 = sphi 0, %s73
      %s75 = sphi 0, %s73
      %s76 = sphi 0, %s75
      %s90 = sphi 0, %s76
      %s94 = sphi 0, %s94
      %s96 = sphi 0, %s94
      %s97 = sphi 0, %s96
      %s111 = sphi 0, %s97
      %s115 = sphi 0, %s115
      %s117 = sphi 0, %s115
      %s118 = sphi 0, %s117
      %s132 = sphi 0, %s118
      %s136 = sphi 0, %s136
      %s138 = sphi 0, %s136
      %s139 = sphi 0, %s138
      %s153 = sphi 0, %s139
      %s157 = sphi 0, %s157
      %s159 = sphi 0, %s157
      %s160 = sphi 0, %s159
      %s174 = sphi 0, %s160
      %s180 = sphi 0, %s182
      %s183 = sphi 0, %s180
      %s184 = sphi 0, %s183
      %s200 = sphi 0, %s184
    $region4: #{tpu_custom_call.1} parent=1 // loop_header_branch
      %21 = sbr.rel (%p19) target = $region8
    $region5: #{tpu_custom_call.1} parent=1 // loop_body
      %s23 = ssub.s32 %s18, 1
      %s24 = ssub.s32 %s18, 2
      %s25 = sadd.s32 %s18, 1
      %s26 = ssub.s32 %s18, %s25
      %p27 = scmp.eq.s32.totalorder %s26, 0
      %s29 = sadd.s32 %s28, 1
      %s30 = scalar_select %p27, %s28, %s29
      %p33 = pneg %p27
      %p34 = scmp.eq.s32.totalorder %s18, 1
      %p35 = por %p33, %p34
      %p36 = scmp.ne.s32.totalorder %s28, %s31
      %p37 = scmp.eq.s32.totalorder %s18, 0
      %p38 = por %p36, %p37
      %p39 = scmp.ne.s32.totalorder %s28, %s31
      %p40 = scmp.eq.s32.totalorder %s23, 1
      %p41 = por %p39, %p40
      %p42 = scmp.ne.s32.totalorder %s31, %s32
      %p43 = scmp.eq.s32.totalorder %s23, 0
      %p44 = por %p42, %p43
      %p45 = scmp.ne.s32.totalorder %s31, %s32
      %p46 = scmp.eq.s32.totalorder %s24, 1
      %p47 = por %p45, %p46
      %p49 = scmp.ne.s32.totalorder %s32, %s48
      %p50 = scmp.eq.s32.totalorder %s24, 0
      %p51 = por %p49, %p50
      %s53 = sadd.s32 %s52, 1
      %p56 = scmp.eq.s32.totalorder %s18, 1
      %p57 = scmp.ne.s32.totalorder %s52, %s54
      %p58 = scmp.eq.s32.totalorder %s18, 0
      %p59 = por %p57, %p58
      %p60 = scmp.ne.s32.totalorder %s52, %s54
      %p61 = scmp.eq.s32.totalorder %s23, 1
      %p62 = por %p60, %p61
      %p63 = scmp.ne.s32.totalorder %s54, %s55
      %p64 = scmp.eq.s32.totalorder %s23, 0
      %p65 = por %p63, %p64
      %p66 = scmp.ne.s32.totalorder %s54, %s55
      %p67 = scmp.eq.s32.totalorder %s24, 1
      %p68 = por %p66, %p67
      %p70 = scmp.ne.s32.totalorder %s55, %s69
      %p71 = scmp.eq.s32.totalorder %s24, 0
      %p72 = por %p70, %p71
      %s74 = sadd.s32 %s73, 1
      %p77 = scmp.eq.s32.totalorder %s18, 1
      %p78 = scmp.ne.s32.totalorder %s73, %s75
      %p79 = scmp.eq.s32.totalorder %s18, 0
      %p80 = por %p78, %p79
      %p81 = scmp.ne.s32.totalorder %s73, %s75
      %p82 = scmp.eq.s32.totalorder %s23, 1
      %p83 = por %p81, %p82
      %p84 = scmp.ne.s32.totalorder %s75, %s76
      %p85 = scmp.eq.s32.totalorder %s23, 0
      %p86 = por %p84, %p85
      %p87 = scmp.ne.s32.totalorder %s75, %s76
      %p88 = scmp.eq.s32.totalorder %s24, 1
      %p89 = por %p87, %p88
      %p91 = scmp.ne.s32.totalorder %s76, %s90
      %p92 = scmp.eq.s32.totalorder %s24, 0
      %p93 = por %p91, %p92
      %s95 = sadd.s32 %s94, 1
      %p98 = scmp.eq.s32.totalorder %s18, 1
      %p99 = scmp.ne.s32.totalorder %s94, %s96
      %p100 = scmp.eq.s32.totalorder %s18, 0
      %p101 = por %p99, %p100
      %p102 = scmp.ne.s32.totalorder %s94, %s96
      %p103 = scmp.eq.s32.totalorder %s23, 1
      %p104 = por %p102, %p103
      %p105 = scmp.ne.s32.totalorder %s96, %s97
      %p106 = scmp.eq.s32.totalorder %s23, 0
      %p107 = por %p105, %p106
      %p108 = scmp.ne.s32.totalorder %s96, %s97
      %p109 = scmp.eq.s32.totalorder %s24, 1
      %p110 = por %p108, %p109
      %p112 = scmp.ne.s32.totalorder %s97, %s111
      %p113 = scmp.eq.s32.totalorder %s24, 0
      %p114 = por %p112, %p113
      %s116 = sadd.s32 %s115, 1
      %p119 = scmp.eq.s32.totalorder %s18, 1
      %p120 = scmp.ne.s32.totalorder %s115, %s117
      %p121 = scmp.eq.s32.totalorder %s18, 0
      %p122 = por %p120, %p121
      %p123 = scmp.ne.s32.totalorder %s115, %s117
      %p124 = scmp.eq.s32.totalorder %s23, 1
      %p125 = por %p123, %p124
      %p126 = scmp.ne.s32.totalorder %s117, %s118
      %p127 = scmp.eq.s32.totalorder %s23, 0
      %p128 = por %p126, %p127
      %p129 = scmp.ne.s32.totalorder %s117, %s118
      %p130 = scmp.eq.s32.totalorder %s24, 1
      %p131 = por %p129, %p130
      %p133 = scmp.ne.s32.totalorder %s118, %s132
      %p134 = scmp.eq.s32.totalorder %s24, 0
      %p135 = por %p133, %p134
      %s137 = sadd.s32 %s136, 1
      %p140 = scmp.eq.s32.totalorder %s18, 1
      %p141 = scmp.ne.s32.totalorder %s136, %s138
      %p142 = scmp.eq.s32.totalorder %s18, 0
      %p143 = por %p141, %p142
      %p144 = scmp.ne.s32.totalorder %s136, %s138
      %p145 = scmp.eq.s32.totalorder %s23, 1
      %p146 = por %p144, %p145
      %p147 = scmp.ne.s32.totalorder %s138, %s139
      %p148 = scmp.eq.s32.totalorder %s23, 0
      %p149 = por %p147, %p148
      %p150 = scmp.ne.s32.totalorder %s138, %s139
      %p151 = scmp.eq.s32.totalorder %s24, 1
      %p152 = por %p150, %p151
      %p154 = scmp.ne.s32.totalorder %s139, %s153
      %p155 = scmp.eq.s32.totalorder %s24, 0
      %p156 = por %p154, %p155
      %s158 = sadd.s32 %s157, 1
      %p161 = scmp.eq.s32.totalorder %s18, 1
      %p162 = scmp.ne.s32.totalorder %s157, %s159
      %p163 = scmp.eq.s32.totalorder %s18, 0
      %p164 = por %p162, %p163
      %p165 = scmp.ne.s32.totalorder %s157, %s159
      %p166 = scmp.eq.s32.totalorder %s23, 1
      %p167 = por %p165, %p166
      %p168 = scmp.ne.s32.totalorder %s159, %s160
      %p169 = scmp.eq.s32.totalorder %s23, 0
      %p170 = por %p168, %p169
      %p171 = scmp.ne.s32.totalorder %s159, %s160
      %p172 = scmp.eq.s32.totalorder %s24, 1
      %p173 = por %p171, %p172
      %p175 = scmp.ne.s32.totalorder %s160, %s174
      %p176 = scmp.eq.s32.totalorder %s24, 0
      %p177 = por %p175, %p176
      %s178 = ssub.s32 %s18, %s25
      %p179 = scmp.eq.s32.totalorder %s178, 0
      %s181 = sadd.s32 %s180, 1
      %s182 = scalar_select %p179, %s180, %s181
      %p185 = pneg %p179
      %p186 = scmp.eq.s32.totalorder %s18, 1
      %p187 = por %p185, %p186
      %p188 = scmp.ne.s32.totalorder %s180, %s183
      %p189 = scmp.eq.s32.totalorder %s18, 0
      %p190 = por %p188, %p189
      %p191 = scmp.ne.s32.totalorder %s180, %s183
      %p192 = scmp.eq.s32.totalorder %s23, 1
      %p193 = por %p191, %p192
      %p194 = scmp.ne.s32.totalorder %s183, %s184
      %p195 = scmp.eq.s32.totalorder %s23, 0
      %p196 = por %p194, %p195
      %p197 = scmp.ne.s32.totalorder %s183, %s184
      %p198 = scmp.eq.s32.totalorder %s24, 1
      %p199 = por %p197, %p198
      %p201 = scmp.ne.s32.totalorder %s184, %s200
      %p202 = scmp.eq.s32.totalorder %s24, 0
      %p203 = por %p201, %p202
      %p204 = scmp.le.s32.totalorder 1, %s18
      %p205 = scmp.lt.s32.totalorder %s18, 3
      %p206 = pnand %p204, %p205
      %p207 = pneg %p206
      // Predicated region
      $region9: #{tpu_custom_call.1} parent=5 // pred_check
        _
      $region10: #{tpu_custom_call.1} parent=5 // pred_check_branch
        %209 = sbr.rel (%p206) target = $region12
      $region11: #{tpu_custom_call.1} parent=5 // pred_region
        %s210 = ssub.s32 %s18, 1
        // Predicated region
        $region13: #{tpu_custom_call.1} parent=11 // pred_check
          %p211 = pneg %p65
        $region14: #{tpu_custom_call.1} parent=11 // pred_check_branch
          %213 = sbr.rel (%p211) target = $region16
        $region15: #{tpu_custom_call.1} parent=11 // pred_region
          _
        $region16: #{tpu_custom_call.1} parent=11 // pred_fallthru
          _
        // Predicated region
        $region17: #{tpu_custom_call.1} parent=11 // pred_check
          %p214 = pneg %p86
        $region18: #{tpu_custom_call.1} parent=11 // pred_check_branch
          %216 = sbr.rel (%p214) target = $region20
        $region19: #{tpu_custom_call.1} parent=11 // pred_region
          _
        $region20: #{tpu_custom_call.1} parent=11 // pred_fallthru
          _
        // Predicated region
        $region21: #{tpu_custom_call.1} parent=11 // pred_check
          %p217 = pneg %p107
        $region22: #{tpu_custom_call.1} parent=11 // pred_check_branch
          %219 = sbr.rel (%p217) target = $region24
        $region23: #{tpu_custom_call.1} parent=11 // pred_region
          %s221 = ssub.s32 2048, 2048
          %222 = vsyncadd [#allocation3], %s221
          %s223 = sshll.u32 [#allocation2], 4
          %s224 = int_to_ptr.vmem [resolvable:$true] %s223
          %229 = dma.hbm_to_vmem [thread:$0]  %s3, 2048, %s224, [#allocation3], 64, 64, 4
        $region24: #{tpu_custom_call.1} parent=11 // pred_fallthru
          _
        // Predicated region
        $region25: #{tpu_custom_call.1} parent=11 // pred_check
          %p230 = pneg %p128
        $region26: #{tpu_custom_call.1} parent=11 // pred_check_branch
          %232 = sbr.rel (%p230) target = $region28
        $region27: #{tpu_custom_call.1} parent=11 // pred_region
          _
        $region28: #{tpu_custom_call.1} parent=11 // pred_fallthru
          _
        // Predicated region
        $region29: #{tpu_custom_call.1} parent=11 // pred_check
          %p233 = pneg %p149
        $region30: #{tpu_custom_call.1} parent=11 // pred_check_branch
          %235 = sbr.rel (%p233) target = $region32
        $region31: #{tpu_custom_call.1} parent=11 // pred_region
          %s237 = ssub.s32 1024, 1024
          %238 = vsyncadd [#allocation6], %s237
          %s239 = sshll.u32 [#allocation5], 4
          %s240 = int_to_ptr.vmem [resolvable:$true] %s239
          %245 = dma.hbm_to_vmem [thread:$0]  %s5, 1024, %s240, [#allocation6], 64, 64, 4
        $region32: #{tpu_custom_call.1} parent=11 // pred_fallthru
          _
        // Predicated region
        $region33: #{tpu_custom_call.1} parent=11 // pred_check
          %p246 = pneg %p170
        $region34: #{tpu_custom_call.1} parent=11 // pred_check_branch
          %248 = sbr.rel (%p246) target = $region36
        $region35: #{tpu_custom_call.1} parent=11 // pred_region
          _
        $region36: #{tpu_custom_call.1} parent=11 // pred_fallthru
          _
      $region12: #{tpu_custom_call.1} parent=5 // pred_fallthru
        _
      %p249 = scmp.lt.s32.totalorder %s18, 2
      // Predicated region
      $region37: #{tpu_custom_call.1} parent=5 // pred_check
        %p250 = pneg %p249
      $region38: #{tpu_custom_call.1} parent=5 // pred_check_branch
        %252 = sbr.rel (%p250) target = $region40
      $region39: #{tpu_custom_call.1} parent=5 // pred_region
        // Predicated region
        $region41: #{tpu_custom_call.1} parent=39 // pred_check
          %p253 = pneg %p38
        $region42: #{tpu_custom_call.1} parent=39 // pred_check_branch
          %255 = sbr.rel (%p253) target = $region44
        $region43: #{tpu_custom_call.1} parent=39 // pred_region
          %s256 = smul.u32 2, %s18
          %p257 = scmp.lt.s32.totalorder %s256, 3
          %s258 = scalar_select %p257, %s256, 3
          %s259 = smul.addr %s258, 4
          %s260 = scalar_lea.vmem %s0, %s259
          %s261 = smul.u32 2, %s18
        $region44: #{tpu_custom_call.1} parent=39 // pred_fallthru
          _
      $region40: #{tpu_custom_call.1} parent=5 // pred_fallthru
        _
      %p262 = scmp.le.s32.totalorder 1, %s18
      %p263 = scmp.lt.s32.totalorder %s18, 3
      %p264 = pnand %p262, %p263
      %p265 = pneg %p264
      // Predicated region
      $region45: #{tpu_custom_call.1} parent=5 // pred_check
        _
      $region46: #{tpu_custom_call.1} parent=5 // pred_check_branch
        %267 = sbr.rel (%p264) target = $region48
      $region47: #{tpu_custom_call.1} parent=5 // pred_region
        %s268 = ssub.s32 %s18, 1
        // Predicated region
        $region49: #{tpu_custom_call.1} parent=47 // pred_check
          %p269 = pneg %p107
        $region50: #{tpu_custom_call.1} parent=47 // pred_check_branch
          %271 = sbr.rel (%p269) target = $region52
        $region51: #{tpu_custom_call.1} parent=47 // pred_region
          %272 = dma.done [#allocation3], 2048
        $region52: #{tpu_custom_call.1} parent=47 // pred_fallthru
          _
        // Predicated region
        $region53: #{tpu_custom_call.1} parent=47 // pred_check
          %p273 = pneg %p149
        $region54: #{tpu_custom_call.1} parent=47 // pred_check_branch
          %275 = sbr.rel (%p273) target = $region56
        $region55: #{tpu_custom_call.1} parent=47 // pred_region
          %276 = dma.done [#allocation6], 1024
        $region56: #{tpu_custom_call.1} parent=47 // pred_fallthru
          _
        %s277 = smul.u32 2, %s23
        %p278 = scmp.lt.s32.totalorder %s277, 3
        %s279 = scalar_select %p278, %s277, 3
        %s280 = smul.addr %s279, 4
        %s281 = scalar_lea.vmem %s0, %s280
        %p282 = pneg %p44
        %p283 = pneg %p41
        %p284 = pneg %p65
        %p285 = pneg %p62
        %p286 = pneg %p86
        %p287 = pneg %p83
        %p288 = pneg %p107
        %p289 = pneg %p104
        %p290 = pneg %p128
        %p291 = pneg %p125
        %p292 = pneg %p149
        %p293 = pneg %p146
        %p294 = pneg %p170
        %p295 = pneg %p167
        %p296 = pneg %p196
        %p297 = pneg %p193
        %s298 = sand.u32 %s183, 1
        %s299 = scalar_lea.sflag [#allocation4], %s298
        %s300 = sand.u32 %s183, 1
        %s301 = smul.addr %s300, 8
        %s302 = scalar_lea.vmem [#allocation7], %s301
        %s303 = smul.u32 2, %s23
        %p304 = scmp.lt.s32.totalorder %s303, 3
        %s305 = scalar_select %p304, %s303, 3
        %s306 = smul.addr %s305, 4
        %s307 = scalar_lea.vmem %s0, %s306
        %s308 = smul.u32 2, %s23
        %s309 = smul.u32 2, %s23
        %v311 = vld [vmem:[%s307] sm:$0xf]
        %v312 = vld [vmem:[%s307 + $0x4] sm:$0xf]
        %v313 = vld [vmem:[%s1] sm:$0xff]
        %v314 = vld [vmem:[%s1 + $0x8] sm:$0xff]
        %v315 = vld [vmem:[%s2] sm:$0x3]
        %v317 = vlaneseq
        %v318 = vshrl.u32 %v317, 7
        %v319 = vsub.s32 0, %v318
        %v320 = vrot.slane %v315, %v319
        %v321 = vlaneseq
        %v322 = vshrl.u32 %v321, 7
        %v323 = vsub.s32 1, %v322
        %v324 = vrot.slane %v315, %v323
        %v329 = vunpack.c.l.b16 %v311
        %v330 = vunpack.c.l.b16 %v312
        %v331 = vpack.c.b16 %v330, %v329
        %v334 = vunpack.c.l.b16 %v313
        %v335 = vunpack.c.h.b16 %v313
        %v336 = vunpack.c.l.b16 %v314
        %v337 = vunpack.c.h.b16 %v314
        %v338 = vpack.c.b16 %v336, %v334
        %v339 = vpack.c.b16 %v337, %v335
        %vm342 = vcmask 130048
        %v344 = vsel %vm342, %v331, 0
        %346 = vmatprep.subr.bf16.mxu0 %v339
        %347 = vmatpush1.bf16.msra.mxu0 %v338
        %348 = vmatprep.subr.bf16.mxu0 0
        %349 = vmatpush1.bf16.msra.mxu0 0
        %350 = vmatprep.subr.bf16.mxu0 0
        %351 = vmatpush1.bf16.msra.mxu0 0
        %352 = vmatprep.subr.bf16.mxu0 0
        %353 = vmatpush1.bf16.msra.mxu0 0
        %354 = vmatprep.subr.bf16.mxu0 0
        %355 = vmatpush1.bf16.msra.mxu0 0
        %356 = vmatprep.subr.bf16.mxu0 0
        %357 = vmatpush1.bf16.msra.mxu0 0
        %358 = vmatprep.subr.bf16.mxu0 0
        %359 = vmatpush1.bf16.msra.mxu0 0
        %360 = vmatprep.subr.bf16.mxu0 0
        %361 = vmatpush1.bf16.msra.mxu0 0
        %362 = vmatprep.subr.bf16.mxu0 0
        %363 = vmatpush1.bf16.msra.mxu0 0
        %364 = vmatprep.subr.bf16.mxu0 0
        %365 = vmatpush1.bf16.msra.mxu0 0
        %366 = vmatprep.subr.bf16.mxu0 0
        %367 = vmatpush1.bf16.msra.mxu0 0
        %368 = vmatprep.subr.bf16.mxu0 0
        %369 = vmatpush1.bf16.msra.mxu0 0
        %370 = vmatprep.subr.bf16.mxu0 0
        %371 = vmatpush1.bf16.msra.mxu0 0
        %372 = vmatprep.subr.bf16.mxu0 0
        %373 = vmatpush1.bf16.msra.mxu0 0
        %374 = vmatprep.subr.bf16.mxu0 0
        %375 = vmatpush1.bf16.msra.mxu0 0
        %376 = vmatprep.subr.bf16.mxu0 0
        %377 = vmatpush1.bf16.msra.mxu0 0
        %378 = vmatprep.mubr.bf16.mxu0 0
        %379 = vmatmul.mubr.bf16.gmra.mrb[0].mxu0 %v344
        %v380 = vpop.f32.mrb[0].mxu0
        %v381 = vadd.f32 %v320, %v380
        %v382 = vpop.f32.mrb[0].mxu0
        %v383 = vadd.f32 %v324, %v382
        %v384 = vpop.f32.mrb[0].mxu0
        %v385 = vadd.f32 %v320, %v384
        %v386 = vpop.f32.mrb[0].mxu0
        %v387 = vadd.f32 %v324, %v386
        %388 = vdwg.mxu0
        %v389 = vmax.f32 %v381, 0.0
        %v390 = vmax.f32 %v383, 0.0
        %v391 = vmax.f32 %v385, 0.0
        %v392 = vmax.f32 %v387, 0.0
        %v393 = vpack.c.bf16 %v391, %v389
        %v394 = vpack.c.bf16 %v392, %v390
        %v395 = vld [vmem:[#allocation2] sm:$0xf]
        %v396 = vld [vmem:[#allocation2 + $0x4] sm:$0xf]
        %v397 = vld [vmem:[#allocation2 + $0x8] sm:$0xf]
        %v398 = vld [vmem:[#allocation2 + $0xc] sm:$0xf]
        %v399 = vld [vmem:[#allocation2 + $0x10] sm:$0xf]
        %v400 = vld [vmem:[#allocation2 + $0x14] sm:$0xf]
        %v401 = vld [vmem:[#allocation2 + $0x18] sm:$0xf]
        %v402 = vld [vmem:[#allocation2 + $0x1c] sm:$0xf]
        %v403 = vld [vmem:[#allocation2 + $0x20] sm:$0xf]
        %v404 = vld [vmem:[#allocation2 + $0x24] sm:$0xf]
        %v405 = vld [vmem:[#allocation2 + $0x28] sm:$0xf]
        %v406 = vld [vmem:[#allocation2 + $0x2c] sm:$0xf]
        %v407 = vld [vmem:[#allocation2 + $0x30] sm:$0xf]
        %v408 = vld [vmem:[#allocation2 + $0x34] sm:$0xf]
        %v409 = vld [vmem:[#allocation2 + $0x38] sm:$0xf]
        %v410 = vld [vmem:[#allocation2 + $0x3c] sm:$0xf]
        %v411 = vld [vmem:[#allocation2 + $0x40] sm:$0xf]
        %v412 = vld [vmem:[#allocation2 + $0x44] sm:$0xf]
        %v413 = vld [vmem:[#allocation2 + $0x48] sm:$0xf]
        %v414 = vld [vmem:[#allocation2 + $0x4c] sm:$0xf]
        %v415 = vld [vmem:[#allocation2 + $0x50] sm:$0xf]
        %v416 = vld [vmem:[#allocation2 + $0x54] sm:$0xf]
        %v417 = vld [vmem:[#allocation2 + $0x58] sm:$0xf]
        %v418 = vld [vmem:[#allocation2 + $0x5c] sm:$0xf]
        %v419 = vld [vmem:[#allocation2 + $0x60] sm:$0xf]
        %v420 = vld [vmem:[#allocation2 + $0x64] sm:$0xf]
        %v421 = vld [vmem:[#allocation2 + $0x68] sm:$0xf]
        %v422 = vld [vmem:[#allocation2 + $0x6c] sm:$0xf]
        %v423 = vld [vmem:[#allocation2 + $0x70] sm:$0xf]
        %v424 = vld [vmem:[#allocation2 + $0x74] sm:$0xf]
        %v425 = vld [vmem:[#allocation2 + $0x78] sm:$0xf]
        %v426 = vld [vmem:[#allocation2 + $0x7c] sm:$0xf]
        %v427 = vld [vmem:[%s4] sm:$0x1]
        %v429 = vlaneseq
        %v430 = vshrl.u32 %v429, 7
        %v431 = vsub.s32 0, %v430
        %v432 = vrot.slane %v427, %v431
        %v466 = vunpack.c.l.b16 %v395
        %v467 = vunpack.c.l.b16 %v396
        %v468 = vunpack.c.l.b16 %v397
        %v469 = vunpack.c.l.b16 %v398
        %v470 = vunpack.c.l.b16 %v399
        %v471 = vunpack.c.l.b16 %v400
        %v472 = vunpack.c.l.b16 %v401
        %v473 = vunpack.c.l.b16 %v402
        %v474 = vunpack.c.l.b16 %v403
        %v475 = vunpack.c.l.b16 %v404
        %v476 = vunpack.c.l.b16 %v405
        %v477 = vunpack.c.l.b16 %v406
        %v478 = vunpack.c.l.b16 %v407
        %v479 = vunpack.c.l.b16 %v408
        %v480 = vunpack.c.l.b16 %v409
        %v481 = vunpack.c.l.b16 %v410
        %v482 = vunpack.c.l.b16 %v411
        %v483 = vunpack.c.l.b16 %v412
        %v484 = vunpack.c.l.b16 %v413
        %v485 = vunpack.c.l.b16 %v414
        %v486 = vunpack.c.l.b16 %v415
        %v487 = vunpack.c.l.b16 %v416
        %v488 = vunpack.c.l.b16 %v417
        %v489 = vunpack.c.l.b16 %v418
        %v490 = vunpack.c.l.b16 %v419
        %v491 = vunpack.c.l.b16 %v420
        %v492 = vunpack.c.l.b16 %v421
        %v493 = vunpack.c.l.b16 %v422
        %v494 = vunpack.c.l.b16 %v423
        %v495 = vunpack.c.l.b16 %v424
        %v496 = vunpack.c.l.b16 %v425
        %v497 = vunpack.c.l.b16 %v426
        %v498 = vpack.c.b16 %v467, %v466
        %v499 = vpack.c.b16 %v469, %v468
        %v500 = vpack.c.b16 %v471, %v470
        %v501 = vpack.c.b16 %v473, %v472
        %v502 = vpack.c.b16 %v475, %v474
        %v503 = vpack.c.b16 %v477, %v476
        %v504 = vpack.c.b16 %v479, %v478
        %v505 = vpack.c.b16 %v481, %v480
        %v506 = vpack.c.b16 %v483, %v482
        %v507 = vpack.c.b16 %v485, %v484
        %v508 = vpack.c.b16 %v487, %v486
        %v509 = vpack.c.b16 %v489, %v488
        %v510 = vpack.c.b16 %v491, %v490
        %v511 = vpack.c.b16 %v493, %v492
        %v512 = vpack.c.b16 %v495, %v494
        %v513 = vpack.c.b16 %v497, %v496
        %530 = vmatprep.subr.bf16.mxu0 0
        %531 = vmatpush1.bf16.msra.mxu0 %v498
        %532 = vmatprep.subr.bf16.mxu0 0
        %533 = vmatpush1.bf16.msra.mxu0 %v499
        %534 = vmatprep.subr.bf16.mxu0 0
        %535 = vmatpush1.bf16.msra.mxu0 %v500
        %536 = vmatprep.subr.bf16.mxu0 0
        %537 = vmatpush1.bf16.msra.mxu0 %v501
        %538 = vmatprep.subr.bf16.mxu0 0
        %539 = vmatpush1.bf16.msra.mxu0 %v502
        %540 = vmatprep.subr.bf16.mxu0 0
        %541 = vmatpush1.bf16.msra.mxu0 %v503
        %542 = vmatprep.subr.bf16.mxu0 0
        %543 = vmatpush1.bf16.msra.mxu0 %v504
        %544 = vmatprep.subr.bf16.mxu0 0
        %545 = vmatpush1.bf16.msra.mxu0 %v505
        %546 = vmatprep.subr.bf16.mxu0 0
        %547 = vmatpush1.bf16.msra.mxu0 %v506
        %548 = vmatprep.subr.bf16.mxu0 0
        %549 = vmatpush1.bf16.msra.mxu0 %v507
        %550 = vmatprep.subr.bf16.mxu0 0
        %551 = vmatpush1.bf16.msra.mxu0 %v508
        %552 = vmatprep.subr.bf16.mxu0 0
        %553 = vmatpush1.bf16.msra.mxu0 %v509
        %554 = vmatprep.subr.bf16.mxu0 0
        %555 = vmatpush1.bf16.msra.mxu0 %v510
        %556 = vmatprep.subr.bf16.mxu0 0
        %557 = vmatpush1.bf16.msra.mxu0 %v511
        %558 = vmatprep.subr.bf16.mxu0 0
        %559 = vmatpush1.bf16.msra.mxu0 %v512
        %560 = vmatprep.subr.bf16.mxu0 0
        %561 = vmatpush1.bf16.msra.mxu0 %v513
        %562 = vmatprep.mubr.bf16.mxu0 %v394
        %563 = vmatmul.mubr.bf16.gmra.mrb[0].mxu0 %v393
        %v564 = vpop.f32.mrb[0].mxu0
        %v565 = vadd.f32 %v432, %v564
        %v566 = vpop.f32.mrb[0].mxu0
        %v567 = vpop.f32.mrb[0].mxu0
        %v568 = vadd.f32 %v432, %v567
        %v569 = vpop.f32.mrb[0].mxu0
        %570 = vdwg.mxu0
        %v571 = vmax.f32 %v565, 0.0
        %v572 = vmax.f32 %v568, 0.0
        %v573 = vpack.c.bf16 %v572, %v571
        %v574 = vld [vmem:[#allocation5] sm:$0xf]
        %v575 = vld [vmem:[#allocation5 + $0x4] sm:$0xf]
        %v576 = vld [vmem:[#allocation5 + $0x8] sm:$0xf]
        %v577 = vld [vmem:[#allocation5 + $0xc] sm:$0xf]
        %v578 = vld [vmem:[#allocation5 + $0x10] sm:$0xf]
        %v579 = vld [vmem:[#allocation5 + $0x14] sm:$0xf]
        %v580 = vld [vmem:[#allocation5 + $0x18] sm:$0xf]
        %v581 = vld [vmem:[#allocation5 + $0x1c] sm:$0xf]
        %v582 = vld [vmem:[#allocation5 + $0x20] sm:$0xf]
        %v583 = vld [vmem:[#allocation5 + $0x24] sm:$0xf]
        %v584 = vld [vmem:[#allocation5 + $0x28] sm:$0xf]
        %v585 = vld [vmem:[#allocation5 + $0x2c] sm:$0xf]
        %v586 = vld [vmem:[#allocation5 + $0x30] sm:$0xf]
        %v587 = vld [vmem:[#allocation5 + $0x34] sm:$0xf]
        %v588 = vld [vmem:[#allocation5 + $0x38] sm:$0xf]
        %v589 = vld [vmem:[#allocation5 + $0x3c] sm:$0xf]
        %v590 = vld [vmem:[%s6] sm:$0x1]
        %v592 = vlaneseq
        %v593 = vshrl.u32 %v592, 7
        %v594 = vsub.s32 0, %v593
        %v595 = vrot.slane %v590, %v594
        %v613 = vunpack.c.l.b16 %v574
        %v614 = vunpack.c.l.b16 %v575
        %v615 = vunpack.c.l.b16 %v576
        %v616 = vunpack.c.l.b16 %v577
        %v617 = vunpack.c.l.b16 %v578
        %v618 = vunpack.c.l.b16 %v579
        %v619 = vunpack.c.l.b16 %v580
        %v620 = vunpack.c.l.b16 %v581
        %v621 = vunpack.c.l.b16 %v582
        %v622 = vunpack.c.l.b16 %v583
        %v623 = vunpack.c.l.b16 %v584
        %v624 = vunpack.c.l.b16 %v585
        %v625 = vunpack.c.l.b16 %v586
        %v626 = vunpack.c.l.b16 %v587
        %v627 = vunpack.c.l.b16 %v588
        %v628 = vunpack.c.l.b16 %v589
        %v629 = vpack.c.b16 %v614, %v613
        %v630 = vpack.c.b16 %v616, %v615
        %v631 = vpack.c.b16 %v618, %v617
        %v632 = vpack.c.b16 %v620, %v619
        %v633 = vpack.c.b16 %v622, %v621
        %v634 = vpack.c.b16 %v624, %v623
        %v635 = vpack.c.b16 %v626, %v625
        %v636 = vpack.c.b16 %v628, %v627
        %645 = vmatprep.subr.bf16.mxu0 0
        %646 = vmatpush1.bf16.msra.mxu0 %v629
        %647 = vmatprep.subr.bf16.mxu0 0
        %648 = vmatpush1.bf16.msra.mxu0 %v630
        %649 = vmatprep.subr.bf16.mxu0 0
        %650 = vmatpush1.bf16.msra.mxu0 %v631
        %651 = vmatprep.subr.bf16.mxu0 0
        %652 = vmatpush1.bf16.msra.mxu0 %v632
        %653 = vmatprep.subr.bf16.mxu0 0
        %654 = vmatpush1.bf16.msra.mxu0 %v633
        %655 = vmatprep.subr.bf16.mxu0 0
        %656 = vmatpush1.bf16.msra.mxu0 %v634
        %657 = vmatprep.subr.bf16.mxu0 0
        %658 = vmatpush1.bf16.msra.mxu0 %v635
        %659 = vmatprep.subr.bf16.mxu0 0
        %660 = vmatpush1.bf16.msra.mxu0 %v636
        %661 = vmatprep.subr.bf16.mxu0 0
        %662 = vmatpush1.bf16.msra.mxu0 0
        %663 = vmatprep.subr.bf16.mxu0 0
        %664 = vmatpush1.bf16.msra.mxu0 0
        %665 = vmatprep.subr.bf16.mxu0 0
        %666 = vmatpush1.bf16.msra.mxu0 0
        %667 = vmatprep.subr.bf16.mxu0 0
        %668 = vmatpush1.bf16.msra.mxu0 0
        %669 = vmatprep.subr.bf16.mxu0 0
        %670 = vmatpush1.bf16.msra.mxu0 0
        %671 = vmatprep.subr.bf16.mxu0 0
        %672 = vmatpush1.bf16.msra.mxu0 0
        %673 = vmatprep.subr.bf16.mxu0 0
        %674 = vmatpush1.bf16.msra.mxu0 0
        %675 = vmatprep.subr.bf16.mxu0 0
        %676 = vmatpush1.bf16.msra.mxu0 0
        %677 = vmatprep.mubr.bf16.mxu0 0
        %678 = vmatmul.mubr.bf16.gmra.mrb[0].mxu0 %v573
        %v679 = vpop.f32.mrb[0].mxu0
        %v680 = vadd.f32 %v595, %v679
        %v681 = vpop.f32.mrb[0].mxu0
        %v682 = vpop.f32.mrb[0].mxu0
        %v683 = vadd.f32 %v595, %v682
        %v684 = vpop.f32.mrb[0].mxu0
        %685 = vdwg.mxu0
        %686 = vmax.xlane.f32.xlu0 %v680
        %v687 = vpop.xlane.xlu0 %686
        %688 = vmax.xlane.f32.xlu0 %v683
        %v689 = vpop.xlane.xlu0 %688
        %v690 = vsub.f32 %v680, %v687
        %v691 = vsub.f32 %v683, %v689
        %v692 = vmul.f32 %v690, 1.442695
        %v693 = vpow.pop %v692
        %v694 = vmul.f32 %v691, 1.442695
        %v695 = vpow.pop %v694
        %696 = vadd.xlane.f32.xlu0 %v693
        %v697 = vpop.xlane.xlu0 %696
        %698 = vadd.xlane.f32.xlu0 %v695
        %v699 = vpop.xlane.xlu0 %698
        %v700 = vrcp.pop %v697
        %v701 = vrcp.pop %v699
        %v702 = vmul.f32 %v693, %v700
        %v703 = vmul.f32 %v695, %v701
        %v704 = vpack.c.bf16 %v703, %v702
        %v706 = vunpack.c.l.b16 %v704
        %v707 = vunpack.c.h.b16 %v704
        %v708 = vpack.c.b16 %v706, %v706
        %v709 = vpack.c.b16 %v707, %v707
        %712 = vst [vmem:[%s302] sm:$0xf] %v708
        %713 = vst [vmem:[%s302 + $0x4] sm:$0xf] %v709
        %s714 = sand.u32 %s183, 1
        %s715 = scalar_lea.sflag [#allocation4], %s714
        %s716 = sand.u32 %s183, 1
        %s717 = smul.addr %s716, 8
        %s718 = scalar_lea.vmem [#allocation7], %s717
        // Predicated region
        $region57: #{tpu_custom_call.1} parent=47 // pred_check
          %p719 = pneg %p193
        $region58: #{tpu_custom_call.1} parent=47 // pred_check_branch
          %721 = sbr.rel (%p719) target = $region60
        $region59: #{tpu_custom_call.1} parent=47 // pred_region
          %s722 = smul.u32 2, %s23
          %s724 = ssub.s32 128, 128
          %725 = vsyncadd %s715, %s724
          %s726 = smul.addr %s722, 64
          %s727 = scalar_lea.hbm %s7, %s726
          %s728 = sshll.u32 %s718, 4
          %s729 = int_to_ptr.vmem [resolvable:$true] %s728
          %734 = dma.vmem_to_hbm [thread:$0]  %s729, 128, %s727, %s715, 64, 64, 4
        $region60: #{tpu_custom_call.1} parent=47 // pred_fallthru
          _
      $region48: #{tpu_custom_call.1} parent=5 // pred_fallthru
        _
      %p735 = scmp.le.s32.totalorder 2, %s18
      // Predicated region
      $region61: #{tpu_custom_call.1} parent=5 // pred_check
        %p736 = pneg %p735
      $region62: #{tpu_custom_call.1} parent=5 // pred_check_branch
        %738 = sbr.rel (%p736) target = $region64
      $region63: #{tpu_custom_call.1} parent=5 // pred_region
        %s739 = ssub.s32 %s18, 2
        // Predicated region
        $region65: #{tpu_custom_call.1} parent=63 // pred_check
          %p740 = pneg %p199
        $region66: #{tpu_custom_call.1} parent=63 // pred_check_branch
          %742 = sbr.rel (%p740) target = $region68
        $region67: #{tpu_custom_call.1} parent=63 // pred_region
          %s743 = sand.u32 %s184, 1
          %s744 = scalar_lea.sflag [#allocation4], %s743
          %s745 = sand.u32 %s184, 1
          %s746 = smul.addr %s745, 8
          %s747 = scalar_lea.vmem [#allocation7], %s746
          %748 = dma.done %s744, 128
        $region68: #{tpu_custom_call.1} parent=63 // pred_fallthru
          _
      $region64: #{tpu_custom_call.1} parent=5 // pred_fallthru
        _
    $region6: #{tpu_custom_call.1} parent=1 // loop_footer
      %s22 = sadd.s32 1, %s18
    $region7: #{tpu_custom_call.1} parent=1 // loop_footer_branch
      %17 = sbr.rel target = $region3
    $region8: #{tpu_custom_call.1} parent=1 // loop_exit
      _
    %749 = vsyncpa [#allocation3], 1
    %s750 = scalar_lea.sflag [#allocation3], 1
    %751 = vsyncpa %s750, 1
    %752 = vsyncpa [#allocation6], 1
    %753 = vsyncpa [#allocation4], 1
    %s754 = scalar_lea.sflag [#allocation4], 1
    %755 = vsyncpa %s754, 1

</llo_original>
